<compile_context>
chip_gen: v5e
topology: v5e:2x2
jax: 0.10.0
libtpu: 0.0.40
codegen_flags: <defaults>
</compile_context>

<pallas_src>
import jax
import jax.numpy as jnp
from jax.experimental import pallas as pl
from jax.experimental.pallas import tpu as pltpu

LANE = 128


def _round_up(n, m):
    return ((n + m - 1) // m) * m


# --------------------------------------------------------------------------- #
# Kernel
# --------------------------------------------------------------------------- #
def mlp_kernel(x_ref, w1, b1, w2, b2, w3, b3, w4, b4, out_ref):
    """Fused MLP forward: 3x [Linear(+folded BN) -> ReLU] -> Linear.

    x and weights are bf16 (lane-padded); biases and accumulation are f32.
    Dropout is identity at inference.
    """

    def hidden(h, w_ref, b_ref):
        z = jnp.dot(h, w_ref[...], preferred_element_type=jnp.float32) + b_ref[...]
        return jnp.maximum(z, 0.0).astype(jnp.bfloat16)

    h = x_ref[...]                      # already bf16 -- no in-kernel cast
    h = hidden(h, w1, b1)
    h = hidden(h, w2, b2)
    h = hidden(h, w3, b3)
    out_ref[...] = jnp.dot(h, w4[...], preferred_element_type=jnp.float32) + b4[...]


# --------------------------------------------------------------------------- #
# Wrapper
# --------------------------------------------------------------------------- #
def _choose_batch_blocking(B, max_block_b):
    """Pad B only to a multiple of 16 and pick a block size that divides it.

    Ensures an even number (>=2) of grid steps whenever there is enough work,
    so v7x's two TensorCores both get batch tiles ("parallel" grid axis).
    """
    B16 = _round_up(B, 16)
    # Enough rows to be worth splitting across two cores?
    min_blocks = 2 if B16 >= 2 * 256 else 1
    num_blocks = max(min_blocks, pl.cdiv(B16, max_block_b))
    if num_blocks > 1 and num_blocks % 2:
        num_blocks += 1                      # even -> balanced across 2 TCs
    block_b = _round_up(pl.cdiv(B16, num_blocks), 16)
    B_pad = num_blocks * block_b             # at most num_blocks*16-ish extra rows
    return block_b, B_pad, num_blocks


def mlp_forward(x, params, n_classes, *, max_block_b=2048):
    """x: [B, n_features] f32.  params: folded/padded [w1,b1,w2,b2,w3,b3,w4,b4]."""
    B, F = x.shape
    n_pad = params[-1].shape[1]

    block_b, B_pad, num_blocks = _choose_batch_blocking(B, max_block_b)
    # Cast activations to bf16 once on the host side of the call (halves input DMA).
    x = x.astype(jnp.bfloat16)
    if B_pad != B:
        x = jnp.pad(x, ((0, B_pad - B), (0, 0)))
    grid = (num_blocks,)

    x_spec = pl.BlockSpec((block_b, F), lambda i: (i, 0))
    # Weights / biases: full array, same block every grid step (VMEM-resident).
    param_specs = [pl.BlockSpec(p.shape, lambda i: (0, 0)) for p in params]
    out_spec = pl.BlockSpec((block_b, n_pad), lambda i: (i, 0))

    flops = 2 * B_pad * sum(w.shape[0] * w.shape[1] for w in params[0::2])
    bytes_accessed = (
        x.size * x.dtype.itemsize
        + sum(p.size * p.dtype.itemsize for p in params)
        + B_pad * n_pad * 4
    )

    out = pl.pallas_call(
        mlp_kernel,
        out_shape=jax.ShapeDtypeStruct((B_pad, n_pad), jnp.float32),
        grid=grid,
        in_specs=[x_spec] + param_specs,
        out_specs=out_spec,
        compiler_params=pltpu.CompilerParams(
            dimension_semantics=("parallel",),
            vmem_limit_bytes=64 * 1024 * 1024,   # fits 2048-row tiles on all gens
        ),
        cost_estimate=pl.CostEstimate(
            flops=flops, transcendentals=0, bytes_accessed=bytes_accessed
        ),
    )(x, *params)
    return out[:B, :n_classes]


# --------------------------------------------------------------------------- #
# Parameter construction (PyTorch-default init, BN folded, lane-padded, bf16)
# --------------------------------------------------------------------------- #
def init_folded_params(key, n_features, n_classes, hidden_dims=(784, 256, 128), eps=1e-5):
    """Returns (kernel_params, ref_params).

    kernel_params: lane-padded bf16 weights + f32 biases for the Pallas kernel.
    ref_params:    folded, un-padded f32 (W, b) pairs for the pure-JAX reference.
    """
    dims = [n_features] + list(hidden_dims)
    kernel_params, ref_params = [], []
    d_in_pad = n_features  # no padding on the input-feature dim
    for d_in, d_out in zip(dims[:-1], dims[1:]):
        key, kw, kb = jax.random.split(key, 3)
        bound = 1.0 / (d_in ** 0.5)
        w = jax.random.uniform(kw, (d_in, d_out), jnp.float32, -bound, bound)
        b = jax.random.uniform(kb, (1, d_out), jnp.float32, -bound, bound)
        # BatchNorm1d eval-mode fold (gamma=1, beta=0, mean=0, var=1 defaults).
        # TODO(synk): plug real running_mean/var/gamma/beta here for a trained checkpoint.
        gamma = jnp.ones((1, d_out), jnp.float32)
        beta = jnp.zeros((1, d_out), jnp.float32)
        mean = jnp.zeros((1, d_out), jnp.float32)
        var = jnp.ones((1, d_out), jnp.float32)
        scale = gamma / jnp.sqrt(var + eps)
        w_f = w * scale                          # column-scale the weights
        b_f = b * scale + (beta - mean * scale)  # fold bias + BN shift
        ref_params.append((w_f, b_f))

        d_out_pad = _round_up(d_out, LANE)
        w_p = jnp.zeros((d_in_pad, d_out_pad), jnp.float32).at[:d_in, :d_out].set(w_f)
        b_p = jnp.zeros((1, d_out_pad), jnp.float32).at[:, :d_out].set(b_f)
        kernel_params += [w_p.astype(jnp.bfloat16), b_p]
        d_in_pad = d_out_pad

    # Final classifier Linear (no BN / activation).
    d_in = dims[-1]
    key, kw, kb = jax.random.split(key, 3)
    bound = 1.0 / (d_in ** 0.5)
    w = jax.random.uniform(kw, (d_in, n_classes), jnp.float32, -bound, bound)
    b = jax.random.uniform(kb, (1, n_classes), jnp.float32, -bound, bound)
    ref_params.append((w, b))

    n_pad = _round_up(n_classes, LANE)
    w_p = jnp.zeros((d_in_pad, n_pad), jnp.float32).at[:d_in, :n_classes].set(w)
    b_p = jnp.zeros((1, n_pad), jnp.float32).at[:, :n_classes].set(b)
    kernel_params += [w_p.astype(jnp.bfloat16), b_p]
    return kernel_params, ref_params


def mlp_forward_ref(x, ref_params):
    """Pure-JAX reference using the same bf16-weight / f32-accumulate math."""
    h = x.astype(jnp.bfloat16)
    *hidden_layers, (w_out, b_out) = ref_params
    for w, b in hidden_layers:
        z = jnp.dot(h, w.astype(jnp.bfloat16), preferred_element_type=jnp.float32) + b
        h = jnp.maximum(z, 0.0).astype(jnp.bfloat16)
    return jnp.dot(h, w_out.astype(jnp.bfloat16), preferred_element_type=jnp.float32) + b_out


# --------------------------------------------------------------------------- #
# Self-test
# --------------------------------------------------------------------------- #
if __name__ == "__main__":
    key = jax.random.PRNGKey(0)
    B, n_features, n_classes = 8, 32, 10
    hidden_dims = (784, 256, 128)

    key, kx, kp = jax.random.split(key, 3)
    x = jax.random.normal(kx, (B, n_features), jnp.float32)
    params, ref_params = init_folded_params(kp, n_features, n_classes, hidden_dims)

    out = mlp_forward(x, params, n_classes)
    out = jax.block_until_ready(out)

    ref = mlp_forward_ref(x, ref_params)
    assert out.shape == (B, n_classes)
    assert jnp.allclose(out, ref, atol=1e-2, rtol=1e-2), "mismatch vs JAX reference"

    print("KERNEL_OK")
</pallas_src>

<mosaic_0001>
module attributes {stable_mosaic.version = 11 : i64} {
  func.func @mlp_kernel(%arg0: i32, %arg1: memref<16x32xbf16, #tpu.memory_space<vmem>>, %arg2: memref<32x896xbf16, #tpu.memory_space<vmem>>, %arg3: memref<1x896xf32, #tpu.memory_space<vmem>>, %arg4: memref<896x256xbf16, #tpu.memory_space<vmem>>, %arg5: memref<1x256xf32, #tpu.memory_space<vmem>>, %arg6: memref<256x128xbf16, #tpu.memory_space<vmem>>, %arg7: memref<1x128xf32, #tpu.memory_space<vmem>>, %arg8: memref<128x128xbf16, #tpu.memory_space<vmem>>, %arg9: memref<1x128xf32, #tpu.memory_space<vmem>>, %arg10: memref<16x128xf32, #tpu.memory_space<vmem>>) attributes {dimension_semantics = [#tpu.dimension_semantics<parallel>], iteration_bounds = array<i64: 1>, scalar_prefetch = 0 : i64, scratch_operands = 0 : i64, tpu.core_type = #tpu.core_type<tc>, window_params = [{transform_indices = @transform_0, window_bounds = array<i64: 16, 32>}, {pipeline_mode = #tpu.pipeline_mode<synchronous>, transform_indices = @transform_1, window_bounds = array<i64: 32, 896>}, {pipeline_mode = #tpu.pipeline_mode<synchronous>, transform_indices = @transform_2, window_bounds = array<i64: 1, 896>}, {pipeline_mode = #tpu.pipeline_mode<synchronous>, transform_indices = @transform_3, window_bounds = array<i64: 896, 256>}, {pipeline_mode = #tpu.pipeline_mode<synchronous>, transform_indices = @transform_4, window_bounds = array<i64: 1, 256>}, {pipeline_mode = #tpu.pipeline_mode<synchronous>, transform_indices = @transform_5, window_bounds = array<i64: 256, 128>}, {pipeline_mode = #tpu.pipeline_mode<synchronous>, transform_indices = @transform_6, window_bounds = array<i64: 1, 128>}, {pipeline_mode = #tpu.pipeline_mode<synchronous>, transform_indices = @transform_7, window_bounds = array<i64: 128, 128>}, {pipeline_mode = #tpu.pipeline_mode<synchronous>, transform_indices = @transform_8, window_bounds = array<i64: 1, 128>}, {transform_indices = @transform_9, window_bounds = array<i64: 16, 128>}]} {
    %c0 = arith.constant 0 : index
    %c0_0 = arith.constant 0 : index
    %0 = vector.load %arg1[%c0, %c0_0] : memref<16x32xbf16, #tpu.memory_space<vmem>>, vector<16x32xbf16>
    %c0_1 = arith.constant 0 : index
    %c0_2 = arith.constant 0 : index
    %1 = vector.load %arg2[%c0_1, %c0_2] : memref<32x896xbf16, #tpu.memory_space<vmem>>, vector<32x896xbf16>
    %cst = arith.constant dense<0.000000e+00> : vector<16x896xf32>
    %2 = tpu.matmul %0, %1, %cst {dimension_numbers = #tpu.dot_dimension_numbers<[1], [0], [0], [1], [0, 0, 1, 1], [], []>} : vector<16x32xbf16>, vector<32x896xbf16>, vector<16x896xf32> -> vector<16x896xf32>
    %c0_3 = arith.constant 0 : index
    %c0_4 = arith.constant 0 : index
    %3 = vector.load %arg3[%c0_3, %c0_4] : memref<1x896xf32, #tpu.memory_space<vmem>>, vector<1x896xf32>
    %4 = vector.broadcast %3 : vector<1x896xf32> to vector<16x896xf32>
    %5 = arith.addf %2, %4 : vector<16x896xf32>
    %cst_5 = arith.constant 0.000000e+00 : f32
    %6 = vector.broadcast %cst_5 : f32 to vector<16x896xf32>
    %7 = arith.maximumf %5, %6 : vector<16x896xf32>
    %8 = arith.truncf %7 : vector<16x896xf32> to vector<16x896xbf16>
    %c0_6 = arith.constant 0 : index
    %c0_7 = arith.constant 0 : index
    %9 = vector.load %arg4[%c0_6, %c0_7] : memref<896x256xbf16, #tpu.memory_space<vmem>>, vector<896x256xbf16>
    %cst_8 = arith.constant dense<0.000000e+00> : vector<16x256xf32>
    %10 = tpu.matmul %8, %9, %cst_8 {dimension_numbers = #tpu.dot_dimension_numbers<[1], [0], [0], [1], [0, 0, 1, 1], [], []>} : vector<16x896xbf16>, vector<896x256xbf16>, vector<16x256xf32> -> vector<16x256xf32>
    %c0_9 = arith.constant 0 : index
    %c0_10 = arith.constant 0 : index
    %11 = vector.load %arg5[%c0_9, %c0_10] : memref<1x256xf32, #tpu.memory_space<vmem>>, vector<1x256xf32>
    %12 = vector.broadcast %11 : vector<1x256xf32> to vector<16x256xf32>
    %13 = arith.addf %10, %12 : vector<16x256xf32>
    %cst_11 = arith.constant 0.000000e+00 : f32
    %14 = vector.broadcast %cst_11 : f32 to vector<16x256xf32>
    %15 = arith.maximumf %13, %14 : vector<16x256xf32>
    %16 = arith.truncf %15 : vector<16x256xf32> to vector<16x256xbf16>
    %c0_12 = arith.constant 0 : index
    %c0_13 = arith.constant 0 : index
    %17 = vector.load %arg6[%c0_12, %c0_13] : memref<256x128xbf16, #tpu.memory_space<vmem>>, vector<256x128xbf16>
    %cst_14 = arith.constant dense<0.000000e+00> : vector<16x128xf32>
    %18 = tpu.matmul %16, %17, %cst_14 {dimension_numbers = #tpu.dot_dimension_numbers<[1], [0], [0], [1], [0, 0, 1, 1], [], []>} : vector<16x256xbf16>, vector<256x128xbf16>, vector<16x128xf32> -> vector<16x128xf32>
    %c0_15 = arith.constant 0 : index
    %c0_16 = arith.constant 0 : index
    %19 = vector.load %arg7[%c0_15, %c0_16] : memref<1x128xf32, #tpu.memory_space<vmem>>, vector<1x128xf32>
    %20 = vector.broadcast %19 : vector<1x128xf32> to vector<16x128xf32>
    %21 = arith.addf %18, %20 : vector<16x128xf32>
    %cst_17 = arith.constant 0.000000e+00 : f32
    %22 = vector.broadcast %cst_17 : f32 to vector<16x128xf32>
    %23 = arith.maximumf %21, %22 : vector<16x128xf32>
    %24 = arith.truncf %23 : vector<16x128xf32> to vector<16x128xbf16>
    %c0_18 = arith.constant 0 : index
    %c0_19 = arith.constant 0 : index
    %25 = vector.load %arg8[%c0_18, %c0_19] : memref<128x128xbf16, #tpu.memory_space<vmem>>, vector<128x128xbf16>
    %cst_20 = arith.constant dense<0.000000e+00> : vector<16x128xf32>
    %26 = tpu.matmul %24, %25, %cst_20 {dimension_numbers = #tpu.dot_dimension_numbers<[1], [0], [0], [1], [0, 0, 1, 1], [], []>} : vector<16x128xbf16>, vector<128x128xbf16>, vector<16x128xf32> -> vector<16x128xf32>
    %c0_21 = arith.constant 0 : index
    %c0_22 = arith.constant 0 : index
    %27 = vector.load %arg9[%c0_21, %c0_22] : memref<1x128xf32, #tpu.memory_space<vmem>>, vector<1x128xf32>
    %28 = vector.broadcast %27 : vector<1x128xf32> to vector<16x128xf32>
    %29 = arith.addf %26, %28 : vector<16x128xf32>
    %c0_23 = arith.constant 0 : index
    %c0_24 = arith.constant 0 : index
    %30 = vector.load %arg10[%c0_23, %c0_24] : memref<16x128xf32, #tpu.memory_space<vmem>>, vector<16x128xf32>
    tpu.vector_store %arg10[%c0_23, %c0_24], %29 {strides = array<i32>} : memref<16x128xf32, #tpu.memory_space<vmem>>, vector<16x128xf32>,
    return
  }
  func.func @transform_0(%arg0: i32) -> (i32, i32) {
    %c0_i32 = arith.constant 0 : i32
    %c0_i32_0 = arith.constant 0 : i32
    return %arg0, %c0_i32 : i32, i32
  }
  func.func @transform_1(%arg0: i32) -> (i32, i32) {
    %c0_i32 = arith.constant 0 : i32
    %c0_i32_0 = arith.constant 0 : i32
    %c0_i32_1 = arith.constant 0 : i32
    return %c0_i32, %c0_i32_0 : i32, i32
  }
  func.func @transform_2(%arg0: i32) -> (i32, i32) {
    %c0_i32 = arith.constant 0 : i32
    %c0_i32_0 = arith.constant 0 : i32
    %c0_i32_1 = arith.constant 0 : i32
    return %c0_i32, %c0_i32_0 : i32, i32
  }
  func.func @transform_3(%arg0: i32) -> (i32, i32) {
    %c0_i32 = arith.constant 0 : i32
    %c0_i32_0 = arith.constant 0 : i32
    %c0_i32_1 = arith.constant 0 : i32
    return %c0_i32, %c0_i32_0 : i32, i32
  }
  func.func @transform_4(%arg0: i32) -> (i32, i32) {
    %c0_i32 = arith.constant 0 : i32
    %c0_i32_0 = arith.constant 0 : i32
    %c0_i32_1 = arith.constant 0 : i32
    return %c0_i32, %c0_i32_0 : i32, i32
  }
  func.func @transform_5(%arg0: i32) -> (i32, i32) {
    %c0_i32 = arith.constant 0 : i32
    %c0_i32_0 = arith.constant 0 : i32
    %c0_i32_1 = arith.constant 0 : i32
    return %c0_i32, %c0_i32_0 : i32, i32
  }
  func.func @transform_6(%arg0: i32) -> (i32, i32) {
    %c0_i32 = arith.constant 0 : i32
    %c0_i32_0 = arith.constant 0 : i32
    %c0_i32_1 = arith.constant 0 : i32
    return %c0_i32, %c0_i32_0 : i32, i32
  }
  func.func @transform_7(%arg0: i32) -> (i32, i32) {
    %c0_i32 = arith.constant 0 : i32
    %c0_i32_0 = arith.constant 0 : i32
    %c0_i32_1 = arith.constant 0 : i32
    return %c0_i32, %c0_i32_0 : i32, i32
  }
  func.func @transform_8(%arg0: i32) -> (i32, i32) {
    %c0_i32 = arith.constant 0 : i32
    %c0_i32_0 = arith.constant 0 : i32
    %c0_i32_1 = arith.constant 0 : i32
    return %c0_i32, %c0_i32_0 : i32, i32
  }
  func.func @transform_9(%arg0: i32) -> (i32, i32) {
    %c0_i32 = arith.constant 0 : i32
    %c0_i32_0 = arith.constant 0 : i32
    return %arg0, %c0_i32 : i32, i32
  }
}

</mosaic_0001>

<llo_original>
// kernel: tpu_custom_call.1
$region0: #{tpu_custom_call.1}
  #allocation0 [shape = 'u32[]', space=smem, size = 0x4, offset = 0x4, fixed_abs, tag = 'smem constant byte address 0x4 - core index']
  #allocation1 [shape = 'u32[72,128]{1,0:T(1,128)}', space=vmem, size = 0x9000, scoped, tag = 'internal scratch']
  %s0 = inlined_call_operand.hbm [shape: bf16[16,32], index: 0, kind: input, shape index: {}]
  %s1 = inlined_call_operand.hbm [shape: bf16[32,896], index: 1, kind: input, shape index: {}]
  %s2 = inlined_call_operand.hbm [shape: f32[1,896], index: 2, kind: input, shape index: {}]
  %s3 = inlined_call_operand.hbm [shape: bf16[896,256], index: 3, kind: input, shape index: {}]
  %s4 = inlined_call_operand.vmem [shape: f32[1,256], index: 4, kind: input, shape index: {}]
  %s5 = inlined_call_operand.hbm [shape: bf16[256,128], index: 5, kind: input, shape index: {}]
  %s6 = inlined_call_operand.vmem [shape: f32[1,128], index: 6, kind: input, shape index: {}]
  %s7 = inlined_call_operand.hbm [shape: bf16[128,128], index: 7, kind: input, shape index: {}]
  %s8 = inlined_call_operand.vmem [shape: f32[1,128], index: 8, kind: input, shape index: {}]
  %s9 = inlined_call_operand.hbm [shape: f32[16,128], index: 9, kind: output, shape index: {}]
  %s10 = sld [smem:[#allocation0]]
  $region70: #{tpu_custom_call.1} parent=0
    _
  %s12 = ssub.s32 1, %s10
  %s13 = scalar_select 0, %s12, %s10
  $region1: #{tpu_custom_call.1} parent=0
    #allocation2 [shape = 'u8[4096]{0}', space=vmem, size = 0x1000, scoped, tag = 'input window, operand 0, single buffered']
    #allocation3 [shape = 's32[1]{0}', space=sflag, size = 0x4, scoped, tag = 'scoped memory for tpu_custom_call.1']
    #allocation4 [shape = 's32[1]{0}', space=sflag, size = 0x4, scoped, tag = 'scoped memory for tpu_custom_call.1']
    #allocation5 [shape = 'u8[57344]{0}', space=vmem, size = 0xe000, scoped, tag = 'input window, operand 1, single buffered']
    #allocation6 [shape = 's32[1]{0}', space=sflag, size = 0x4, scoped, tag = 'scoped memory for tpu_custom_call.1']
    #allocation7 [shape = 'u8[3584]{0}', space=vmem, size = 0x1000, scoped, tag = 'input window, operand 2, single buffered']
    #allocation8 [shape = 'u8[458752]{0}', space=vmem, size = 0x70000, scoped, tag = 'input window, operand 3, single buffered']
    #allocation9 [shape = 's32[1]{0}', space=sflag, size = 0x4, scoped, tag = 'scoped memory for tpu_custom_call.1']
    #allocation10 [shape = 'u8[65536]{0}', space=vmem, size = 0x10000, scoped, tag = 'input window, operand 5, single buffered']
    #allocation11 [shape = 'u8[32768]{0}', space=vmem, size = 0x8000, scoped, tag = 'input window, operand 7, single buffered']
    #allocation12 [shape = 's32[1]{0}', space=sflag, size = 0x4, scoped, tag = 'scoped memory for tpu_custom_call.1']
    #allocation13 [shape = 'u8[8192]{0}', space=vmem, size = 0x2000, scoped, tag = 'output window, operand 0, single buffered']
    %14 = vsyncpa [#allocation3], 0
    %15 = vsyncpa [#allocation6], 0
    %16 = vsyncpa [#allocation9], 0
    %17 = vsyncpa [#allocation12], 0
    %18 = vsyncpa [#allocation4], 0
    // Predicated region
    $region2: #{tpu_custom_call.1} parent=1 // pred_check
      _
    $region3: #{tpu_custom_call.1} parent=1 // pred_check_branch
      %20 = sbr.rel (0) target = $region5
    $region4: #{tpu_custom_call.1} parent=1 // pred_region
      %22 = vsyncadd [#allocation3], 0
      %s23 = sshll.u32 %s0, 4
      %s24 = int_to_ptr.hbm [resolvable:$true] %s23
      %s25 = sshll.u32 [#allocation2], 4
      %s26 = int_to_ptr.vmem [resolvable:$true] %s25
      %31 = dma.hbm_to_vmem [thread:$0]  %s24, 128, %s26, [#allocation3], 64, 64, 4
    $region5: #{tpu_custom_call.1} parent=1 // pred_fallthru
      _
    // Predicated region
    $region6: #{tpu_custom_call.1} parent=1 // pred_check
      _
    $region7: #{tpu_custom_call.1} parent=1 // pred_check_branch
      %33 = sbr.rel (0) target = $region9
    $region8: #{tpu_custom_call.1} parent=1 // pred_region
      %35 = vsyncadd [#allocation6], 0
      %s36 = sshll.u32 %s1, 4
      %s37 = int_to_ptr.hbm [resolvable:$true] %s36
      %s38 = sshll.u32 [#allocation5], 4
      %s39 = int_to_ptr.vmem [resolvable:$true] %s38
      %44 = dma.hbm_to_vmem [thread:$0]  %s37, 1792, %s39, [#allocation6], 448, 448, 28
    $region9: #{tpu_custom_call.1} parent=1 // pred_fallthru
      _
    // Predicated region
    $region10: #{tpu_custom_call.1} parent=1 // pred_check
      _
    $region11: #{tpu_custom_call.1} parent=1 // pred_check_branch
      %46 = sbr.rel (0) target = $region13
    $region12: #{tpu_custom_call.1} parent=1 // pred_region
      %48 = vsyncadd [#allocation6], 0
      %s50 = sshll.u32 %s2, 4
      %s51 = int_to_ptr.hbm [resolvable:$true] %s50
      %s52 = sshll.u32 [#allocation7], 4
      %s53 = int_to_ptr.vmem [resolvable:$true] %s52
      %55 = dma.hbm_to_vmem [thread:$0]  %s51, 112, %s53, [#allocation6]
    $region13: #{tpu_custom_call.1} parent=1 // pred_fallthru
      _
    // Predicated region
    $region14: #{tpu_custom_call.1} parent=1 // pred_check
      _
    $region15: #{tpu_custom_call.1} parent=1 // pred_check_branch
      %57 = sbr.rel (0) target = $region17
    $region16: #{tpu_custom_call.1} parent=1 // pred_region
      %59 = vsyncadd [#allocation9], 0
      %s60 = sshll.u32 %s3, 4
      %s61 = int_to_ptr.hbm [resolvable:$true] %s60
      %s62 = sshll.u32 [#allocation8], 4
      %s63 = int_to_ptr.vmem [resolvable:$true] %s62
      %68 = dma.hbm_to_vmem [thread:$0]  %s61, 14336, %s63, [#allocation9], 128, 128, 8
    $region17: #{tpu_custom_call.1} parent=1 // pred_fallthru
      _
    // Predicated region
    $region18: #{tpu_custom_call.1} parent=1 // pred_check
      _
    $region19: #{tpu_custom_call.1} parent=1 // pred_check_branch
      %70 = sbr.rel (0) target = $region21
    $region20: #{tpu_custom_call.1} parent=1 // pred_region
      _
    $region21: #{tpu_custom_call.1} parent=1 // pred_fallthru
      _
    // Predicated region
    $region22: #{tpu_custom_call.1} parent=1 // pred_check
      _
    $region23: #{tpu_custom_call.1} parent=1 // pred_check_branch
      %72 = sbr.rel (0) target = $region25
    $region24: #{tpu_custom_call.1} parent=1 // pred_region
      %74 = vsyncadd [#allocation9], 0
      %s75 = sshll.u32 %s5, 4
      %s76 = int_to_ptr.hbm [resolvable:$true] %s75
      %s77 = sshll.u32 [#allocation10], 4
      %s78 = int_to_ptr.vmem [resolvable:$true] %s77
      %83 = dma.hbm_to_vmem [thread:$0]  %s76, 2048, %s78, [#allocation9], 64, 64, 4
    $region25: #{tpu_custom_call.1} parent=1 // pred_fallthru
      _
    // Predicated region
    $region26: #{tpu_custom_call.1} parent=1 // pred_check
      _
    $region27: #{tpu_custom_call.1} parent=1 // pred_check_branch
      %85 = sbr.rel (0) target = $region29
    $region28: #{tpu_custom_call.1} parent=1 // pred_region
      _
    $region29: #{tpu_custom_call.1} parent=1 // pred_fallthru
      _
    // Predicated region
    $region30: #{tpu_custom_call.1} parent=1 // pred_check
      _
    $region31: #{tpu_custom_call.1} parent=1 // pred_check_branch
      %87 = sbr.rel (0) target = $region33
    $region32: #{tpu_custom_call.1} parent=1 // pred_region
      %89 = vsyncadd [#allocation12], 0
      %s90 = sshll.u32 %s7, 4
      %s91 = int_to_ptr.hbm [resolvable:$true] %s90
      %s92 = sshll.u32 [#allocation11], 4
      %s93 = int_to_ptr.vmem [resolvable:$true] %s92
      %98 = dma.hbm_to_vmem [thread:$0]  %s91, 1024, %s93, [#allocation12], 64, 64, 4
    $region33: #{tpu_custom_call.1} parent=1 // pred_fallthru
      _
    // Predicated region
    $region34: #{tpu_custom_call.1} parent=1 // pred_check
      _
    $region35: #{tpu_custom_call.1} parent=1 // pred_check_branch
      %100 = sbr.rel (0) target = $region37
    $region36: #{tpu_custom_call.1} parent=1 // pred_region
      _
    $region37: #{tpu_custom_call.1} parent=1 // pred_fallthru
      _
    // Predicated region
    $region38: #{tpu_custom_call.1} parent=1 // pred_check
      _
    $region39: #{tpu_custom_call.1} parent=1 // pred_check_branch
      %102 = sbr.rel (0) target = $region41
    $region40: #{tpu_custom_call.1} parent=1 // pred_region
      %104 = dma.done [#allocation3], 128
    $region41: #{tpu_custom_call.1} parent=1 // pred_fallthru
      _
    // Predicated region
    $region42: #{tpu_custom_call.1} parent=1 // pred_check
      _
    $region43: #{tpu_custom_call.1} parent=1 // pred_check_branch
      %106 = sbr.rel (0) target = $region45
    $region44: #{tpu_custom_call.1} parent=1 // pred_region
      %108 = dma.done [#allocation6], 1792
    $region45: #{tpu_custom_call.1} parent=1 // pred_fallthru
      _
    // Predicated region
    $region46: #{tpu_custom_call.1} parent=1 // pred_check
      _
    $region47: #{tpu_custom_call.1} parent=1 // pred_check_branch
      %110 = sbr.rel (0) target = $region49
    $region48: #{tpu_custom_call.1} parent=1 // pred_region
      %112 = dma.done [#allocation6], 112
    $region49: #{tpu_custom_call.1} parent=1 // pred_fallthru
      _
    // Predicated region
    $region50: #{tpu_custom_call.1} parent=1 // pred_check
      _
    $region51: #{tpu_custom_call.1} parent=1 // pred_check_branch
      %114 = sbr.rel (0) target = $region53
    $region52: #{tpu_custom_call.1} parent=1 // pred_region
      %116 = dma.done [#allocation9], 14336
    $region53: #{tpu_custom_call.1} parent=1 // pred_fallthru
      _
    // Predicated region
    $region54: #{tpu_custom_call.1} parent=1 // pred_check
      _
    $region55: #{tpu_custom_call.1} parent=1 // pred_check_branch
      %118 = sbr.rel (0) target = $region57
    $region56: #{tpu_custom_call.1} parent=1 // pred_region
      %120 = dma.done [#allocation9], 2048
    $region57: #{tpu_custom_call.1} parent=1 // pred_fallthru
      _
    // Predicated region
    $region58: #{tpu_custom_call.1} parent=1 // pred_check
      _
    $region59: #{tpu_custom_call.1} parent=1 // pred_check_branch
      %122 = sbr.rel (0) target = $region61
    $region60: #{tpu_custom_call.1} parent=1 // pred_region
      %124 = dma.done [#allocation12], 1024
    $region61: #{tpu_custom_call.1} parent=1 // pred_fallthru
      _
    %v126 = vld [vmem:[#allocation2] sm:$0xf]
    %v127 = vld [vmem:[#allocation2 + $0x4] sm:$0xf]
    %v128 = vld [vmem:[#allocation5] sm:$0xff]
    %v129 = vld [vmem:[#allocation5 + $0x8] sm:$0xff]
    %v130 = vld [vmem:[#allocation5 + $0x10] sm:$0xff]
    %v131 = vld [vmem:[#allocation5 + $0x18] sm:$0xf]
    %v132 = vld [vmem:[#allocation5 + $0x1c] sm:$0xff]
    %v133 = vld [vmem:[#allocation5 + $0x24] sm:$0xff]
    %v134 = vld [vmem:[#allocation5 + $0x2c] sm:$0xff]
    %v135 = vld [vmem:[#allocation5 + $0x34] sm:$0xf]
    %v136 = vld [vmem:[#allocation5 + $0x38] sm:$0xff]
    %v137 = vld [vmem:[#allocation5 + $0x40] sm:$0xff]
    %v138 = vld [vmem:[#allocation5 + $0x48] sm:$0xff]
    %v139 = vld [vmem:[#allocation5 + $0x50] sm:$0xf]
    %v140 = vld [vmem:[#allocation5 + $0x54] sm:$0xff]
    %v141 = vld [vmem:[#allocation5 + $0x5c] sm:$0xff]
    %v142 = vld [vmem:[#allocation5 + $0x64] sm:$0xff]
    %v143 = vld [vmem:[#allocation5 + $0x6c] sm:$0xf]
    %v144 = vld [vmem:[#allocation7] sm:$0xff]
    %v146 = vperm.slane %v144, 0
    %v147 = vperm.slane %v144, 1
    %v148 = vperm.slane %v144, 2
    %v149 = vperm.slane %v144, 3
    %v150 = vperm.slane %v144, 4
    %v151 = vperm.slane %v144, 5
    %v152 = vperm.slane %v144, 6
    %v162 = vunpack.c.l.b16 %v126
    %v163 = vunpack.c.l.b16 %v127
    %v164 = vpack.c.b16 %v163, %v162
    %v181 = vunpack.c.l.b16 %v128
    %v182 = vunpack.c.h.b16 %v128
    %v183 = vunpack.c.l.b16 %v129
    %v184 = vunpack.c.h.b16 %v129
    %v185 = vunpack.c.l.b16 %v130
    %v186 = vunpack.c.h.b16 %v130
    %v187 = vunpack.c.l.b16 %v131
    %v188 = vunpack.c.l.b16 %v132
    %v189 = vunpack.c.h.b16 %v132
    %v190 = vunpack.c.l.b16 %v133
    %v191 = vunpack.c.h.b16 %v133
    %v192 = vunpack.c.l.b16 %v134
    %v193 = vunpack.c.h.b16 %v134
    %v194 = vunpack.c.l.b16 %v135
    %v195 = vunpack.c.l.b16 %v136
    %v196 = vunpack.c.h.b16 %v136
    %v197 = vunpack.c.l.b16 %v137
    %v198 = vunpack.c.h.b16 %v137
    %v199 = vunpack.c.l.b16 %v138
    %v200 = vunpack.c.h.b16 %v138
    %v201 = vunpack.c.l.b16 %v139
    %v202 = vunpack.c.l.b16 %v140
    %v203 = vunpack.c.h.b16 %v140
    %v204 = vunpack.c.l.b16 %v141
    %v205 = vunpack.c.h.b16 %v141
    %v206 = vunpack.c.l.b16 %v142
    %v207 = vunpack.c.h.b16 %v142
    %v208 = vunpack.c.l.b16 %v143
    %v209 = vpack.c.b16 %v188, %v181
    %v210 = vpack.c.b16 %v189, %v182
    %v211 = vpack.c.b16 %v190, %v183
    %v212 = vpack.c.b16 %v191, %v184
    %v213 = vpack.c.b16 %v192, %v185
    %v214 = vpack.c.b16 %v193, %v186
    %v215 = vpack.c.b16 %v194, %v187
    %v216 = vpack.c.b16 %v202, %v195
    %v217 = vpack.c.b16 %v203, %v196
    %v218 = vpack.c.b16 %v204, %v197
    %v219 = vpack.c.b16 %v205, %v198
    %v220 = vpack.c.b16 %v206, %v199
    %v221 = vpack.c.b16 %v207, %v200
    %v222 = vpack.c.b16 %v208, %v201
    %vm237 = vcmask 261120
    %v239 = vsel %vm237, %v164, 0
    %241 = vmatpush.bf16.msra.mxu0 0
    %242 = vmatpush.bf16.msra.mxu0 0
    %243 = vmatpush.bf16.msra.mxu0 0
    %244 = vmatpush.bf16.msra.mxu0 0
    %245 = vmatpush.bf16.msra.mxu0 0
    %246 = vmatpush.bf16.msra.mxu0 0
    %247 = vmatpush.bf16.msra.mxu0 %v216
    %248 = vmatpush.bf16.msra.mxu0 %v209
    %249 = vmatmul.bf16.gmra.mxu0 %v239
    %v250 = vpop.f32.mrf.mxu0
    %v251 = vadd.f32 %v146, %v250
    %v252 = vpop.f32.mrf.mxu0
    %v253 = vadd.f32 %v146, %v252
    %254 = vdwg.mxu0
    %255 = vmatpush.bf16.msra.mxu0 0
    %256 = vmatpush.bf16.msra.mxu0 0
    %257 = vmatpush.bf16.msra.mxu0 0
    %258 = vmatpush.bf16.msra.mxu0 0
    %259 = vmatpush.bf16.msra.mxu0 0
    %260 = vmatpush.bf16.msra.mxu0 0
    %261 = vmatpush.bf16.msra.mxu0 %v217
    %262 = vmatpush.bf16.msra.mxu0 %v210
    %263 = vmatmul.bf16.gmra.mxu0 %v239
    %v264 = vpop.f32.mrf.mxu0
    %v265 = vadd.f32 %v147, %v264
    %v266 = vpop.f32.mrf.mxu0
    %v267 = vadd.f32 %v147, %v266
    %268 = vdwg.mxu0
    %269 = vmatpush.bf16.msra.mxu0 0
    %270 = vmatpush.bf16.msra.mxu0 0
    %271 = vmatpush.bf16.msra.mxu0 0
    %272 = vmatpush.bf16.msra.mxu0 0
    %273 = vmatpush.bf16.msra.mxu0 0
    %274 = vmatpush.bf16.msra.mxu0 0
    %275 = vmatpush.bf16.msra.mxu0 %v218
    %276 = vmatpush.bf16.msra.mxu0 %v211
    %277 = vmatmul.bf16.gmra.mxu0 %v239
    %v278 = vpop.f32.mrf.mxu0
    %v279 = vadd.f32 %v148, %v278
    %v280 = vpop.f32.mrf.mxu0
    %v281 = vadd.f32 %v148, %v280
    %282 = vdwg.mxu0
    %283 = vmatpush.bf16.msra.mxu0 0
    %284 = vmatpush.bf16.msra.mxu0 0
    %285 = vmatpush.bf16.msra.mxu0 0
    %286 = vmatpush.bf16.msra.mxu0 0
    %287 = vmatpush.bf16.msra.mxu0 0
    %288 = vmatpush.bf16.msra.mxu0 0
    %289 = vmatpush.bf16.msra.mxu0 %v219
    %290 = vmatpush.bf16.msra.mxu0 %v212
    %291 = vmatmul.bf16.gmra.mxu0 %v239
    %v292 = vpop.f32.mrf.mxu0
    %v293 = vadd.f32 %v149, %v292
    %v294 = vpop.f32.mrf.mxu0
    %v295 = vadd.f32 %v149, %v294
    %296 = vdwg.mxu0
    %297 = vmatpush.bf16.msra.mxu0 0
    %298 = vmatpush.bf16.msra.mxu0 0
    %299 = vmatpush.bf16.msra.mxu0 0
    %300 = vmatpush.bf16.msra.mxu0 0
    %301 = vmatpush.bf16.msra.mxu0 0
    %302 = vmatpush.bf16.msra.mxu0 0
    %303 = vmatpush.bf16.msra.mxu0 %v220
    %304 = vmatpush.bf16.msra.mxu0 %v213
    %305 = vmatmul.bf16.gmra.mxu0 %v239
    %v306 = vpop.f32.mrf.mxu0
    %v307 = vadd.f32 %v150, %v306
    %v308 = vpop.f32.mrf.mxu0
    %v309 = vadd.f32 %v150, %v308
    %310 = vdwg.mxu0
    %311 = vmatpush.bf16.msra.mxu0 0
    %312 = vmatpush.bf16.msra.mxu0 0
    %313 = vmatpush.bf16.msra.mxu0 0
    %314 = vmatpush.bf16.msra.mxu0 0
    %315 = vmatpush.bf16.msra.mxu0 0
    %316 = vmatpush.bf16.msra.mxu0 0
    %317 = vmatpush.bf16.msra.mxu0 %v221
    %318 = vmatpush.bf16.msra.mxu0 %v214
    %319 = vmatmul.bf16.gmra.mxu0 %v239
    %v320 = vpop.f32.mrf.mxu0
    %v321 = vadd.f32 %v151, %v320
    %v322 = vpop.f32.mrf.mxu0
    %v323 = vadd.f32 %v151, %v322
    %324 = vdwg.mxu0
    %325 = vmatpush.bf16.msra.mxu0 0
    %326 = vmatpush.bf16.msra.mxu0 0
    %327 = vmatpush.bf16.msra.mxu0 0
    %328 = vmatpush.bf16.msra.mxu0 0
    %329 = vmatpush.bf16.msra.mxu0 0
    %330 = vmatpush.bf16.msra.mxu0 0
    %331 = vmatpush.bf16.msra.mxu0 %v222
    %332 = vmatpush.bf16.msra.mxu0 %v215
    %333 = vmatmul.bf16.gmra.mxu0 %v239
    %v334 = vpop.f32.mrf.mxu0
    %v335 = vadd.f32 %v152, %v334
    %v336 = vpop.f32.mrf.mxu0
    %v337 = vadd.f32 %v152, %v336
    %338 = vdwg.mxu0
    %v339 = vmax.f32 %v251, 0.0
    %v340 = vmax.f32 %v265, 0.0
    %v341 = vmax.f32 %v279, 0.0
    %v342 = vmax.f32 %v293, 0.0
    %v343 = vmax.f32 %v307, 0.0
    %v344 = vmax.f32 %v321, 0.0
    %v345 = vmax.f32 %v335, 0.0
    %v346 = vmax.f32 %v253, 0.0
    %v347 = vmax.f32 %v267, 0.0
    %v348 = vmax.f32 %v281, 0.0
    %v349 = vmax.f32 %v295, 0.0
    %v350 = vmax.f32 %v309, 0.0
    %v351 = vmax.f32 %v323, 0.0
    %v352 = vmax.f32 %v337, 0.0
    %v353 = vpack.c.bf16 %v346, %v339
    %v354 = vpack.c.bf16 %v347, %v340
    %v355 = vpack.c.bf16 %v348, %v341
    %v356 = vpack.c.bf16 %v349, %v342
    %v357 = vpack.c.bf16 %v350, %v343
    %v358 = vpack.c.bf16 %v351, %v344
    %v359 = vpack.c.bf16 %v352, %v345
    %v360 = vld [vmem:[#allocation8] sm:$0xff]
    %v361 = vld [vmem:[#allocation8 + $0x8] sm:$0xff]
    %v362 = vld [vmem:[#allocation8 + $0x10] sm:$0xff]
    %v363 = vld [vmem:[#allocation8 + $0x18] sm:$0xff]
    %v364 = vld [vmem:[#allocation8 + $0x20] sm:$0xff]
    %v365 = vld [vmem:[#allocation8 + $0x28] sm:$0xff]
    %v366 = vld [vmem:[#allocation8 + $0x30] sm:$0xff]
    %v367 = vld [vmem:[#allocation8 + $0x38] sm:$0xff]
    %v368 = vld [vmem:[#allocation8 + $0x40] sm:$0xff]
    %v369 = vld [vmem:[#allocation8 + $0x48] sm:$0xff]
    %v370 = vld [vmem:[#allocation8 + $0x50] sm:$0xff]
    %v371 = vld [vmem:[#allocation8 + $0x58] sm:$0xff]
    %v372 = vld [vmem:[#allocation8 + $0x60] sm:$0xff]
    %v373 = vld [vmem:[#allocation8 + $0x68] sm:$0xff]
    %v374 = vld [vmem:[#allocation8 + $0x70] sm:$0xff]
    %v375 = vld [vmem:[#allocation8 + $0x78] sm:$0xff]
    %v376 = vld [vmem:[#allocation8 + $0x80] sm:$0xff]
    %v377 = vld [vmem:[#allocation8 + $0x88] sm:$0xff]
    %v378 = vld [vmem:[#allocation8 + $0x90] sm:$0xff]
    %v379 = vld [vmem:[#allocation8 + $0x98] sm:$0xff]
    %v380 = vld [vmem:[#allocation8 + $0xa0] sm:$0xff]
    %v381 = vld [vmem:[#allocation8 + $0xa8] sm:$0xff]
    %v382 = vld [vmem:[#allocation8 + $0xb0] sm:$0xff]
    %v383 = vld [vmem:[#allocation8 + $0xb8] sm:$0xff]
    %v384 = vld [vmem:[#allocation8 + $0xc0] sm:$0xff]
    %v385 = vld [vmem:[#allocation8 + $0xc8] sm:$0xff]
    %v386 = vld [vmem:[#allocation8 + $0xd0] sm:$0xff]
    %v387 = vld [vmem:[#allocation8 + $0xd8] sm:$0xff]
    %v388 = vld [vmem:[#allocation8 + $0xe0] sm:$0xff]
    %v389 = vld [vmem:[#allocation8 + $0xe8] sm:$0xff]
    %v390 = vld [vmem:[#allocation8 + $0xf0] sm:$0xff]
    %v391 = vld [vmem:[#allocation8 + $0xf8] sm:$0xff]
    %v392 = vld [vmem:[#allocation8 + $0x100] sm:$0xff]
    %v393 = vld [vmem:[#allocation8 + $0x108] sm:$0xff]
    %v394 = vld [vmem:[#allocation8 + $0x110] sm:$0xff]
    %v395 = vld [vmem:[#allocation8 + $0x118] sm:$0xff]
    %v396 = vld [vmem:[#allocation8 + $0x120] sm:$0xff]
    %v397 = vld [vmem:[#allocation8 + $0x128] sm:$0xff]
    %v398 = vld [vmem:[#allocation8 + $0x130] sm:$0xff]
    %v399 = vld [vmem:[#allocation8 + $0x138] sm:$0xff]
    %v400 = vld [vmem:[#allocation8 + $0x140] sm:$0xff]
    %v401 = vld [vmem:[#allocation8 + $0x148] sm:$0xff]
    %v402 = vld [vmem:[#allocation8 + $0x150] sm:$0xff]
    %v403 = vld [vmem:[#allocation8 + $0x158] sm:$0xff]
    %v404 = vld [vmem:[#allocation8 + $0x160] sm:$0xff]
    %v405 = vld [vmem:[#allocation8 + $0x168] sm:$0xff]
    %v406 = vld [vmem:[#allocation8 + $0x170] sm:$0xff]
    %v407 = vld [vmem:[#allocation8 + $0x178] sm:$0xff]
    %v408 = vld [vmem:[#allocation8 + $0x180] sm:$0xff]
    %v409 = vld [vmem:[#allocation8 + $0x188] sm:$0xff]
    %v410 = vld [vmem:[#allocation8 + $0x190] sm:$0xff]
    %v411 = vld [vmem:[#allocation8 + $0x198] sm:$0xff]
    %v412 = vld [vmem:[#allocation8 + $0x1a0] sm:$0xff]
    %v413 = vld [vmem:[#allocation8 + $0x1a8] sm:$0xff]
    %v414 = vld [vmem:[#allocation8 + $0x1b0] sm:$0xff]
    %v415 = vld [vmem:[#allocation8 + $0x1b8] sm:$0xff]
    %v416 = vld [vmem:[#allocation8 + $0x1c0] sm:$0xff]
    %v417 = vld [vmem:[#allocation8 + $0x1c8] sm:$0xff]
    %v418 = vld [vmem:[#allocation8 + $0x1d0] sm:$0xff]
    %v419 = vld [vmem:[#allocation8 + $0x1d8] sm:$0xff]
    %v420 = vld [vmem:[#allocation8 + $0x1e0] sm:$0xff]
    %v421 = vld [vmem:[#allocation8 + $0x1e8] sm:$0xff]
    %v422 = vld [vmem:[#allocation8 + $0x1f0] sm:$0xff]
    %v423 = vld [vmem:[#allocation8 + $0x1f8] sm:$0xff]
    %v424 = vld [vmem:[#allocation8 + $0x200] sm:$0xff]
    %v425 = vld [vmem:[#allocation8 + $0x208] sm:$0xff]
    %v426 = vld [vmem:[#allocation8 + $0x210] sm:$0xff]
    %v427 = vld [vmem:[#allocation8 + $0x218] sm:$0xff]
    %v428 = vld [vmem:[#allocation8 + $0x220] sm:$0xff]
    %v429 = vld [vmem:[#allocation8 + $0x228] sm:$0xff]
    %v430 = vld [vmem:[#allocation8 + $0x230] sm:$0xff]
    %v431 = vld [vmem:[#allocation8 + $0x238] sm:$0xff]
    %v432 = vld [vmem:[#allocation8 + $0x240] sm:$0xff]
    %v433 = vld [vmem:[#allocation8 + $0x248] sm:$0xff]
    %v434 = vld [vmem:[#allocation8 + $0x250] sm:$0xff]
    %v435 = vld [vmem:[#allocation8 + $0x258] sm:$0xff]
    %v436 = vld [vmem:[#allocation8 + $0x260] sm:$0xff]
    %v437 = vld [vmem:[#allocation8 + $0x268] sm:$0xff]
    %v438 = vld [vmem:[#allocation8 + $0x270] sm:$0xff]
    %v439 = vld [vmem:[#allocation8 + $0x278] sm:$0xff]
    %v440 = vld [vmem:[#allocation8 + $0x280] sm:$0xff]
    %v441 = vld [vmem:[#allocation8 + $0x288] sm:$0xff]
    %v442 = vld [vmem:[#allocation8 + $0x290] sm:$0xff]
    %v443 = vld [vmem:[#allocation8 + $0x298] sm:$0xff]
    %v444 = vld [vmem:[#allocation8 + $0x2a0] sm:$0xff]
    %v445 = vld [vmem:[#allocation8 + $0x2a8] sm:$0xff]
    %v446 = vld [vmem:[#allocation8 + $0x2b0] sm:$0xff]
    %v447 = vld [vmem:[#allocation8 + $0x2b8] sm:$0xff]
    %v448 = vld [vmem:[#allocation8 + $0x2c0] sm:$0xff]
    %v449 = vld [vmem:[#allocation8 + $0x2c8] sm:$0xff]
    %v450 = vld [vmem:[#allocation8 + $0x2d0] sm:$0xff]
    %v451 = vld [vmem:[#allocation8 + $0x2d8] sm:$0xff]
    %v452 = vld [vmem:[#allocation8 + $0x2e0] sm:$0xff]
    %v453 = vld [vmem:[#allocation8 + $0x2e8] sm:$0xff]
    %v454 = vld [vmem:[#allocation8 + $0x2f0] sm:$0xff]
    %v455 = vld [vmem:[#allocation8 + $0x2f8] sm:$0xff]
    %v456 = vld [vmem:[#allocation8 + $0x300] sm:$0xff]
    %v457 = vld [vmem:[#allocation8 + $0x308] sm:$0xff]
    %v458 = vld [vmem:[#allocation8 + $0x310] sm:$0xff]
    %v459 = vld [vmem:[#allocation8 + $0x318] sm:$0xff]
    %v460 = vld [vmem:[#allocation8 + $0x320] sm:$0xff]
    %v461 = vld [vmem:[#allocation8 + $0x328] sm:$0xff]
    %v462 = vld [vmem:[#allocation8 + $0x330] sm:$0xff]
    %v463 = vld [vmem:[#allocation8 + $0x338] sm:$0xff]
    %v464 = vld [vmem:[#allocation8 + $0x340] sm:$0xff]
    %v465 = vld [vmem:[#allocation8 + $0x348] sm:$0xff]
    %v466 = vld [vmem:[#allocation8 + $0x350] sm:$0xff]
    %v467 = vld [vmem:[#allocation8 + $0x358] sm:$0xff]
    %v468 = vld [vmem:[#allocation8 + $0x360] sm:$0xff]
    %v469 = vld [vmem:[#allocation8 + $0x368] sm:$0xff]
    %v470 = vld [vmem:[#allocation8 + $0x370] sm:$0xff]
    %v471 = vld [vmem:[#allocation8 + $0x378] sm:$0xff]
    %v472 = vld [vmem:[%s4] sm:$0x3]
    %v474 = vperm.slane %v472, 0
    %v475 = vperm.slane %v472, 1
    %v590 = vunpack.c.l.b16 %v360
    %v591 = vunpack.c.h.b16 %v360
    %v592 = vunpack.c.l.b16 %v361
    %v593 = vunpack.c.h.b16 %v361
    %v594 = vunpack.c.l.b16 %v362
    %v595 = vunpack.c.h.b16 %v362
    %v596 = vunpack.c.l.b16 %v363
    %v597 = vunpack.c.h.b16 %v363
    %v598 = vunpack.c.l.b16 %v364
    %v599 = vunpack.c.h.b16 %v364
    %v600 = vunpack.c.l.b16 %v365
    %v601 = vunpack.c.h.b16 %v365
    %v602 = vunpack.c.l.b16 %v366
    %v603 = vunpack.c.h.b16 %v366
    %v604 = vunpack.c.l.b16 %v367
    %v605 = vunpack.c.h.b16 %v367
    %v606 = vunpack.c.l.b16 %v368
    %v607 = vunpack.c.h.b16 %v368
    %v608 = vunpack.c.l.b16 %v369
    %v609 = vunpack.c.h.b16 %v369
    %v610 = vunpack.c.l.b16 %v370
    %v611 = vunpack.c.h.b16 %v370
    %v612 = vunpack.c.l.b16 %v371
    %v613 = vunpack.c.h.b16 %v371
    %v614 = vunpack.c.l.b16 %v372
    %v615 = vunpack.c.h.b16 %v372
    %v616 = vunpack.c.l.b16 %v373
    %v617 = vunpack.c.h.b16 %v373
    %v618 = vunpack.c.l.b16 %v374
    %v619 = vunpack.c.h.b16 %v374
    %v620 = vunpack.c.l.b16 %v375
    %v621 = vunpack.c.h.b16 %v375
    %v622 = vunpack.c.l.b16 %v376
    %v623 = vunpack.c.h.b16 %v376
    %v624 = vunpack.c.l.b16 %v377
    %v625 = vunpack.c.h.b16 %v377
    %v626 = vunpack.c.l.b16 %v378
    %v627 = vunpack.c.h.b16 %v378
    %v628 = vunpack.c.l.b16 %v379
    %v629 = vunpack.c.h.b16 %v379
    %v630 = vunpack.c.l.b16 %v380
    %v631 = vunpack.c.h.b16 %v380
    %v632 = vunpack.c.l.b16 %v381
    %v633 = vunpack.c.h.b16 %v381
    %v634 = vunpack.c.l.b16 %v382
    %v635 = vunpack.c.h.b16 %v382
    %v636 = vunpack.c.l.b16 %v383
    %v637 = vunpack.c.h.b16 %v383
    %v638 = vunpack.c.l.b16 %v384
    %v639 = vunpack.c.h.b16 %v384
    %v640 = vunpack.c.l.b16 %v385
    %v641 = vunpack.c.h.b16 %v385
    %v642 = vunpack.c.l.b16 %v386
    %v643 = vunpack.c.h.b16 %v386
    %v644 = vunpack.c.l.b16 %v387
    %v645 = vunpack.c.h.b16 %v387
    %v646 = vunpack.c.l.b16 %v388
    %v647 = vunpack.c.h.b16 %v388
    %v648 = vunpack.c.l.b16 %v389
    %v649 = vunpack.c.h.b16 %v389
    %v650 = vunpack.c.l.b16 %v390
    %v651 = vunpack.c.h.b16 %v390
    %v652 = vunpack.c.l.b16 %v391
    %v653 = vunpack.c.h.b16 %v391
    %v654 = vunpack.c.l.b16 %v392
    %v655 = vunpack.c.h.b16 %v392
    %v656 = vunpack.c.l.b16 %v393
    %v657 = vunpack.c.h.b16 %v393
    %v658 = vunpack.c.l.b16 %v394
    %v659 = vunpack.c.h.b16 %v394
    %v660 = vunpack.c.l.b16 %v395
    %v661 = vunpack.c.h.b16 %v395
    %v662 = vunpack.c.l.b16 %v396
    %v663 = vunpack.c.h.b16 %v396
    %v664 = vunpack.c.l.b16 %v397
    %v665 = vunpack.c.h.b16 %v397
    %v666 = vunpack.c.l.b16 %v398
    %v667 = vunpack.c.h.b16 %v398
    %v668 = vunpack.c.l.b16 %v399
    %v669 = vunpack.c.h.b16 %v399
    %v670 = vunpack.c.l.b16 %v400
    %v671 = vunpack.c.h.b16 %v400
    %v672 = vunpack.c.l.b16 %v401
    %v673 = vunpack.c.h.b16 %v401
    %v674 = vunpack.c.l.b16 %v402
    %v675 = vunpack.c.h.b16 %v402
    %v676 = vunpack.c.l.b16 %v403
    %v677 = vunpack.c.h.b16 %v403
    %v678 = vunpack.c.l.b16 %v404
    %v679 = vunpack.c.h.b16 %v404
    %v680 = vunpack.c.l.b16 %v405
    %v681 = vunpack.c.h.b16 %v405
    %v682 = vunpack.c.l.b16 %v406
    %v683 = vunpack.c.h.b16 %v406
    %v684 = vunpack.c.l.b16 %v407
    %v685 = vunpack.c.h.b16 %v407
    %v686 = vunpack.c.l.b16 %v408
    %v687 = vunpack.c.h.b16 %v408
    %v688 = vunpack.c.l.b16 %v409
    %v689 = vunpack.c.h.b16 %v409
    %v690 = vunpack.c.l.b16 %v410
    %v691 = vunpack.c.h.b16 %v410
    %v692 = vunpack.c.l.b16 %v411
    %v693 = vunpack.c.h.b16 %v411
    %v694 = vunpack.c.l.b16 %v412
    %v695 = vunpack.c.h.b16 %v412
    %v696 = vunpack.c.l.b16 %v413
    %v697 = vunpack.c.h.b16 %v413
    %v698 = vunpack.c.l.b16 %v414
    %v699 = vunpack.c.h.b16 %v414
    %v700 = vunpack.c.l.b16 %v415
    %v701 = vunpack.c.h.b16 %v415
    %v702 = vunpack.c.l.b16 %v416
    %v703 = vunpack.c.h.b16 %v416
    %v704 = vunpack.c.l.b16 %v417
    %v705 = vunpack.c.h.b16 %v417
    %v706 = vunpack.c.l.b16 %v418
    %v707 = vunpack.c.h.b16 %v418
    %v708 = vunpack.c.l.b16 %v419
    %v709 = vunpack.c.h.b16 %v419
    %v710 = vunpack.c.l.b16 %v420
    %v711 = vunpack.c.h.b16 %v420
    %v712 = vunpack.c.l.b16 %v421
    %v713 = vunpack.c.h.b16 %v421
    %v714 = vunpack.c.l.b16 %v422
    %v715 = vunpack.c.h.b16 %v422
    %v716 = vunpack.c.l.b16 %v423
    %v717 = vunpack.c.h.b16 %v423
    %v718 = vunpack.c.l.b16 %v424
    %v719 = vunpack.c.h.b16 %v424
    %v720 = vunpack.c.l.b16 %v425
    %v721 = vunpack.c.h.b16 %v425
    %v722 = vunpack.c.l.b16 %v426
    %v723 = vunpack.c.h.b16 %v426
    %v724 = vunpack.c.l.b16 %v427
    %v725 = vunpack.c.h.b16 %v427
    %v726 = vunpack.c.l.b16 %v428
    %v727 = vunpack.c.h.b16 %v428
    %v728 = vunpack.c.l.b16 %v429
    %v729 = vunpack.c.h.b16 %v429
    %v730 = vunpack.c.l.b16 %v430
    %v731 = vunpack.c.h.b16 %v430
    %v732 = vunpack.c.l.b16 %v431
    %v733 = vunpack.c.h.b16 %v431
    %v734 = vunpack.c.l.b16 %v432
    %v735 = vunpack.c.h.b16 %v432
    %v736 = vunpack.c.l.b16 %v433
    %v737 = vunpack.c.h.b16 %v433
    %v738 = vunpack.c.l.b16 %v434
    %v739 = vunpack.c.h.b16 %v434
    %v740 = vunpack.c.l.b16 %v435
    %v741 = vunpack.c.h.b16 %v435
    %v742 = vunpack.c.l.b16 %v436
    %v743 = vunpack.c.h.b16 %v436
    %v744 = vunpack.c.l.b16 %v437
    %v745 = vunpack.c.h.b16 %v437
    %v746 = vunpack.c.l.b16 %v438
    %v747 = vunpack.c.h.b16 %v438
    %v748 = vunpack.c.l.b16 %v439
    %v749 = vunpack.c.h.b16 %v439
    %v750 = vunpack.c.l.b16 %v440
    %v751 = vunpack.c.h.b16 %v440
    %v752 = vunpack.c.l.b16 %v441
    %v753 = vunpack.c.h.b16 %v441
    %v754 = vunpack.c.l.b16 %v442
    %v755 = vunpack.c.h.b16 %v442
    %v756 = vunpack.c.l.b16 %v443
    %v757 = vunpack.c.h.b16 %v443
    %v758 = vunpack.c.l.b16 %v444
    %v759 = vunpack.c.h.b16 %v444
    %v760 = vunpack.c.l.b16 %v445
    %v761 = vunpack.c.h.b16 %v445
    %v762 = vunpack.c.l.b16 %v446
    %v763 = vunpack.c.h.b16 %v446
    %v764 = vunpack.c.l.b16 %v447
    %v765 = vunpack.c.h.b16 %v447
    %v766 = vunpack.c.l.b16 %v448
    %v767 = vunpack.c.h.b16 %v448
    %v768 = vunpack.c.l.b16 %v449
    %v769 = vunpack.c.h.b16 %v449
    %v770 = vunpack.c.l.b16 %v450
    %v771 = vunpack.c.h.b16 %v450
    %v772 = vunpack.c.l.b16 %v451
    %v773 = vunpack.c.h.b16 %v451
    %v774 = vunpack.c.l.b16 %v452
    %v775 = vunpack.c.h.b16 %v452
    %v776 = vunpack.c.l.b16 %v453
    %v777 = vunpack.c.h.b16 %v453
    %v778 = vunpack.c.l.b16 %v454
    %v779 = vunpack.c.h.b16 %v454
    %v780 = vunpack.c.l.b16 %v455
    %v781 = vunpack.c.h.b16 %v455
    %v782 = vunpack.c.l.b16 %v456
    %v783 = vunpack.c.h.b16 %v456
    %v784 = vunpack.c.l.b16 %v457
    %v785 = vunpack.c.h.b16 %v457
    %v786 = vunpack.c.l.b16 %v458
    %v787 = vunpack.c.h.b16 %v458
    %v788 = vunpack.c.l.b16 %v459
    %v789 = vunpack.c.h.b16 %v459
    %v790 = vunpack.c.l.b16 %v460
    %v791 = vunpack.c.h.b16 %v460
    %v792 = vunpack.c.l.b16 %v461
    %v793 = vunpack.c.h.b16 %v461
    %v794 = vunpack.c.l.b16 %v462
    %v795 = vunpack.c.h.b16 %v462
    %v796 = vunpack.c.l.b16 %v463
    %v797 = vunpack.c.h.b16 %v463
    %v798 = vunpack.c.l.b16 %v464
    %v799 = vunpack.c.h.b16 %v464
    %v800 = vunpack.c.l.b16 %v465
    %v801 = vunpack.c.h.b16 %v465
    %v802 = vunpack.c.l.b16 %v466
    %v803 = vunpack.c.h.b16 %v466
    %v804 = vunpack.c.l.b16 %v467
    %v805 = vunpack.c.h.b16 %v467
    %v806 = vunpack.c.l.b16 %v468
    %v807 = vunpack.c.h.b16 %v468
    %v808 = vunpack.c.l.b16 %v469
    %v809 = vunpack.c.h.b16 %v469
    %v810 = vunpack.c.l.b16 %v470
    %v811 = vunpack.c.h.b16 %v470
    %v812 = vunpack.c.l.b16 %v471
    %v813 = vunpack.c.h.b16 %v471
    %v814 = vpack.c.b16 %v592, %v590
    %v815 = vpack.c.b16 %v593, %v591
    %v816 = vpack.c.b16 %v596, %v594
    %v817 = vpack.c.b16 %v597, %v595
    %v818 = vpack.c.b16 %v600, %v598
    %v819 = vpack.c.b16 %v601, %v599
    %v820 = vpack.c.b16 %v604, %v602
    %v821 = vpack.c.b16 %v605, %v603
    %v822 = vpack.c.b16 %v608, %v606
    %v823 = vpack.c.b16 %v609, %v607
    %v824 = vpack.c.b16 %v612, %v610
    %v825 = vpack.c.b16 %v613, %v611
    %v826 = vpack.c.b16 %v616, %v614
    %v827 = vpack.c.b16 %v617, %v615
    %v828 = vpack.c.b16 %v620, %v618
    %v829 = vpack.c.b16 %v621, %v619
    %v830 = vpack.c.b16 %v624, %v622
    %v831 = vpack.c.b16 %v625, %v623
    %v832 = vpack.c.b16 %v628, %v626
    %v833 = vpack.c.b16 %v629, %v627
    %v834 = vpack.c.b16 %v632, %v630
    %v835 = vpack.c.b16 %v633, %v631
    %v836 = vpack.c.b16 %v636, %v634
    %v837 = vpack.c.b16 %v637, %v635
    %v838 = vpack.c.b16 %v640, %v638
    %v839 = vpack.c.b16 %v641, %v639
    %v840 = vpack.c.b16 %v644, %v642
    %v841 = vpack.c.b16 %v645, %v643
    %v842 = vpack.c.b16 %v648, %v646
    %v843 = vpack.c.b16 %v649, %v647
    %v844 = vpack.c.b16 %v652, %v650
    %v845 = vpack.c.b16 %v653, %v651
    %v846 = vpack.c.b16 %v656, %v654
    %v847 = vpack.c.b16 %v657, %v655
    %v848 = vpack.c.b16 %v660, %v658
    %v849 = vpack.c.b16 %v661, %v659
    %v850 = vpack.c.b16 %v664, %v662
    %v851 = vpack.c.b16 %v665, %v663
    %v852 = vpack.c.b16 %v668, %v666
    %v853 = vpack.c.b16 %v669, %v667
    %v854 = vpack.c.b16 %v672, %v670
    %v855 = vpack.c.b16 %v673, %v671
    %v856 = vpack.c.b16 %v676, %v674
    %v857 = vpack.c.b16 %v677, %v675
    %v858 = vpack.c.b16 %v680, %v678
    %v859 = vpack.c.b16 %v681, %v679
    %v860 = vpack.c.b16 %v684, %v682
    %v861 = vpack.c.b16 %v685, %v683
    %v862 = vpack.c.b16 %v688, %v686
    %v863 = vpack.c.b16 %v689, %v687
    %v864 = vpack.c.b16 %v692, %v690
    %v865 = vpack.c.b16 %v693, %v691
    %v866 = vpack.c.b16 %v696, %v694
    %v867 = vpack.c.b16 %v697, %v695
    %v868 = vpack.c.b16 %v700, %v698
    %v869 = vpack.c.b16 %v701, %v699
    %v870 = vpack.c.b16 %v704, %v702
    %v871 = vpack.c.b16 %v705, %v703
    %v872 = vpack.c.b16 %v708, %v706
    %v873 = vpack.c.b16 %v709, %v707
    %v874 = vpack.c.b16 %v712, %v710
    %v875 = vpack.c.b16 %v713, %v711
    %v876 = vpack.c.b16 %v716, %v714
    %v877 = vpack.c.b16 %v717, %v715
    %v878 = vpack.c.b16 %v720, %v718
    %v879 = vpack.c.b16 %v721, %v719
    %v880 = vpack.c.b16 %v724, %v722
    %v881 = vpack.c.b16 %v725, %v723
    %v882 = vpack.c.b16 %v728, %v726
    %v883 = vpack.c.b16 %v729, %v727
    %v884 = vpack.c.b16 %v732, %v730
    %v885 = vpack.c.b16 %v733, %v731
    %v886 = vpack.c.b16 %v736, %v734
    %v887 = vpack.c.b16 %v737, %v735
    %v888 = vpack.c.b16 %v740, %v738
    %v889 = vpack.c.b16 %v741, %v739
    %v890 = vpack.c.b16 %v744, %v742
    %v891 = vpack.c.b16 %v745, %v743
    %v892 = vpack.c.b16 %v748, %v746
    %v893 = vpack.c.b16 %v749, %v747
    %v894 = vpack.c.b16 %v752, %v750
    %v895 = vpack.c.b16 %v753, %v751
    %v896 = vpack.c.b16 %v756, %v754
    %v897 = vpack.c.b16 %v757, %v755
    %v898 = vpack.c.b16 %v760, %v758
    %v899 = vpack.c.b16 %v761, %v759
    %v900 = vpack.c.b16 %v764, %v762
    %v901 = vpack.c.b16 %v765, %v763
    %v902 = vpack.c.b16 %v768, %v766
    %v903 = vpack.c.b16 %v769, %v767
    %v904 = vpack.c.b16 %v772, %v770
    %v905 = vpack.c.b16 %v773, %v771
    %v906 = vpack.c.b16 %v776, %v774
    %v907 = vpack.c.b16 %v777, %v775
    %v908 = vpack.c.b16 %v780, %v778
    %v909 = vpack.c.b16 %v781, %v779
    %v910 = vpack.c.b16 %v784, %v782
    %v911 = vpack.c.b16 %v785, %v783
    %v912 = vpack.c.b16 %v788, %v786
    %v913 = vpack.c.b16 %v789, %v787
    %v914 = vpack.c.b16 %v792, %v790
    %v915 = vpack.c.b16 %v793, %v791
    %v916 = vpack.c.b16 %v796, %v794
    %v917 = vpack.c.b16 %v797, %v795
    %v918 = vpack.c.b16 %v800, %v798
    %v919 = vpack.c.b16 %v801, %v799
    %v920 = vpack.c.b16 %v804, %v802
    %v921 = vpack.c.b16 %v805, %v803
    %v922 = vpack.c.b16 %v808, %v806
    %v923 = vpack.c.b16 %v809, %v807
    %v924 = vpack.c.b16 %v812, %v810
    %v925 = vpack.c.b16 %v813, %v811
    %1038 = vmatpush.bf16.msra.mxu0 %v828
    %1039 = vmatpush.bf16.msra.mxu0 %v826
    %1040 = vmatpush.bf16.msra.mxu0 %v824
    %1041 = vmatpush.bf16.msra.mxu0 %v822
    %1042 = vmatpush.bf16.msra.mxu0 %v820
    %1043 = vmatpush.bf16.msra.mxu0 %v818
    %1044 = vmatpush.bf16.msra.mxu0 %v816
    %1045 = vmatpush.bf16.msra.mxu0 %v814
    %1046 = vmatmul.bf16.gmra.mxu0 %v353
    %v1047 = vpop.f32.mrf.mxu0
    %v1048 = vadd.f32 %v474, %v1047
    %v1049 = vpop.f32.mrf.mxu0
    %v1050 = vadd.f32 %v474, %v1049
    %1051 = vdwg.mxu0
    %1052 = vmatpush.bf16.msra.mxu0 %v844
    %1053 = vmatpush.bf16.msra.mxu0 %v842
    %1054 = vmatpush.bf16.msra.mxu0 %v840
    %1055 = vmatpush.bf16.msra.mxu0 %v838
    %1056 = vmatpush.bf16.msra.mxu0 %v836
    %1057 = vmatpush.bf16.msra.mxu0 %v834
    %1058 = vmatpush.bf16.msra.mxu0 %v832
    %1059 = vmatpush.bf16.msra.mxu0 %v830
    %1060 = vmatmul.bf16.gmra.mxu0 %v354
    %v1061 = vpop.f32.mrf.mxu0
    %v1062 = vadd.f32 %v1048, %v1061
    %v1063 = vpop.f32.mrf.mxu0
    %v1064 = vadd.f32 %v1050, %v1063
    %1065 = vdwg.mxu0
    %1066 = vmatpush.bf16.msra.mxu0 %v860
    %1067 = vmatpush.bf16.msra.mxu0 %v858
    %1068 = vmatpush.bf16.msra.mxu0 %v856
    %1069 = vmatpush.bf16.msra.mxu0 %v854
    %1070 = vmatpush.bf16.msra.mxu0 %v852
    %1071 = vmatpush.bf16.msra.mxu0 %v850
    %1072 = vmatpush.bf16.msra.mxu0 %v848
    %1073 = vmatpush.bf16.msra.mxu0 %v846
    %1074 = vmatmul.bf16.gmra.mxu0 %v355
    %v1075 = vpop.f32.mrf.mxu0
    %v1076 = vadd.f32 %v1062, %v1075
    %v1077 = vpop.f32.mrf.mxu0
    %v1078 = vadd.f32 %v1064, %v1077
    %1079 = vdwg.mxu0
    %1080 = vmatpush.bf16.msra.mxu0 %v876
    %1081 = vmatpush.bf16.msra.mxu0 %v874
    %1082 = vmatpush.bf16.msra.mxu0 %v872
    %1083 = vmatpush.bf16.msra.mxu0 %v870
    %1084 = vmatpush.bf16.msra.mxu0 %v868
    %1085 = vmatpush.bf16.msra.mxu0 %v866
    %1086 = vmatpush.bf16.msra.mxu0 %v864
    %1087 = vmatpush.bf16.msra.mxu0 %v862
    %1088 = vmatmul.bf16.gmra.mxu0 %v356
    %v1089 = vpop.f32.mrf.mxu0
    %v1090 = vadd.f32 %v1076, %v1089
    %v1091 = vpop.f32.mrf.mxu0
    %v1092 = vadd.f32 %v1078, %v1091
    %1093 = vdwg.mxu0
    %1094 = vmatpush.bf16.msra.mxu0 %v892
    %1095 = vmatpush.bf16.msra.mxu0 %v890
    %1096 = vmatpush.bf16.msra.mxu0 %v888
    %1097 = vmatpush.bf16.msra.mxu0 %v886
    %1098 = vmatpush.bf16.msra.mxu0 %v884
    %1099 = vmatpush.bf16.msra.mxu0 %v882
    %1100 = vmatpush.bf16.msra.mxu0 %v880
    %1101 = vmatpush.bf16.msra.mxu0 %v878
    %1102 = vmatmul.bf16.gmra.mxu0 %v357
    %v1103 = vpop.f32.mrf.mxu0
    %v1104 = vadd.f32 %v1090, %v1103
    %v1105 = vpop.f32.mrf.mxu0
    %v1106 = vadd.f32 %v1092, %v1105
    %1107 = vdwg.mxu0
    %1108 = vmatpush.bf16.msra.mxu0 %v908
    %1109 = vmatpush.bf16.msra.mxu0 %v906
    %1110 = vmatpush.bf16.msra.mxu0 %v904
    %1111 = vmatpush.bf16.msra.mxu0 %v902
    %1112 = vmatpush.bf16.msra.mxu0 %v900
    %1113 = vmatpush.bf16.msra.mxu0 %v898
    %1114 = vmatpush.bf16.msra.mxu0 %v896
    %1115 = vmatpush.bf16.msra.mxu0 %v894
    %1116 = vmatmul.bf16.gmra.mxu0 %v358
    %v1117 = vpop.f32.mrf.mxu0
    %v1118 = vadd.f32 %v1104, %v1117
    %v1119 = vpop.f32.mrf.mxu0
    %v1120 = vadd.f32 %v1106, %v1119
    %1121 = vdwg.mxu0
    %1122 = vmatpush.bf16.msra.mxu0 %v924
    %1123 = vmatpush.bf16.msra.mxu0 %v922
    %1124 = vmatpush.bf16.msra.mxu0 %v920
    %1125 = vmatpush.bf16.msra.mxu0 %v918
    %1126 = vmatpush.bf16.msra.mxu0 %v916
    %1127 = vmatpush.bf16.msra.mxu0 %v914
    %1128 = vmatpush.bf16.msra.mxu0 %v912
    %1129 = vmatpush.bf16.msra.mxu0 %v910
    %1130 = vmatmul.bf16.gmra.mxu0 %v359
    %v1131 = vpop.f32.mrf.mxu0
    %v1132 = vadd.f32 %v1118, %v1131
    %v1133 = vpop.f32.mrf.mxu0
    %v1134 = vadd.f32 %v1120, %v1133
    %1135 = vdwg.mxu0
    %1136 = vmatpush.bf16.msra.mxu0 %v829
    %1137 = vmatpush.bf16.msra.mxu0 %v827
    %1138 = vmatpush.bf16.msra.mxu0 %v825
    %1139 = vmatpush.bf16.msra.mxu0 %v823
    %1140 = vmatpush.bf16.msra.mxu0 %v821
    %1141 = vmatpush.bf16.msra.mxu0 %v819
    %1142 = vmatpush.bf16.msra.mxu0 %v817
    %1143 = vmatpush.bf16.msra.mxu0 %v815
    %1144 = vmatmul.bf16.gmra.mxu0 %v353
    %v1145 = vpop.f32.mrf.mxu0
    %v1146 = vadd.f32 %v475, %v1145
    %v1147 = vpop.f32.mrf.mxu0
    %v1148 = vadd.f32 %v475, %v1147
    %1149 = vdwg.mxu0
    %1150 = vmatpush.bf16.msra.mxu0 %v845
    %1151 = vmatpush.bf16.msra.mxu0 %v843
    %1152 = vmatpush.bf16.msra.mxu0 %v841
    %1153 = vmatpush.bf16.msra.mxu0 %v839
    %1154 = vmatpush.bf16.msra.mxu0 %v837
    %1155 = vmatpush.bf16.msra.mxu0 %v835
    %1156 = vmatpush.bf16.msra.mxu0 %v833
    %1157 = vmatpush.bf16.msra.mxu0 %v831
    %1158 = vmatmul.bf16.gmra.mxu0 %v354
    %v1159 = vpop.f32.mrf.mxu0
    %v1160 = vadd.f32 %v1146, %v1159
    %v1161 = vpop.f32.mrf.mxu0
    %v1162 = vadd.f32 %v1148, %v1161
    %1163 = vdwg.mxu0
    %1164 = vmatpush.bf16.msra.mxu0 %v861
    %1165 = vmatpush.bf16.msra.mxu0 %v859
    %1166 = vmatpush.bf16.msra.mxu0 %v857
    %1167 = vmatpush.bf16.msra.mxu0 %v855
    %1168 = vmatpush.bf16.msra.mxu0 %v853
    %1169 = vmatpush.bf16.msra.mxu0 %v851
    %1170 = vmatpush.bf16.msra.mxu0 %v849
    %1171 = vmatpush.bf16.msra.mxu0 %v847
    %1172 = vmatmul.bf16.gmra.mxu0 %v355
    %v1173 = vpop.f32.mrf.mxu0
    %v1174 = vadd.f32 %v1160, %v1173
    %v1175 = vpop.f32.mrf.mxu0
    %v1176 = vadd.f32 %v1162, %v1175
    %1177 = vdwg.mxu0
    %1178 = vmatpush.bf16.msra.mxu0 %v877
    %1179 = vmatpush.bf16.msra.mxu0 %v875
    %1180 = vmatpush.bf16.msra.mxu0 %v873
    %1181 = vmatpush.bf16.msra.mxu0 %v871
    %1182 = vmatpush.bf16.msra.mxu0 %v869
    %1183 = vmatpush.bf16.msra.mxu0 %v867
    %1184 = vmatpush.bf16.msra.mxu0 %v865
    %1185 = vmatpush.bf16.msra.mxu0 %v863
    %1186 = vmatmul.bf16.gmra.mxu0 %v356
    %v1187 = vpop.f32.mrf.mxu0
    %v1188 = vadd.f32 %v1174, %v1187
    %v1189 = vpop.f32.mrf.mxu0
    %v1190 = vadd.f32 %v1176, %v1189
    %1191 = vdwg.mxu0
    %1192 = vmatpush.bf16.msra.mxu0 %v893
    %1193 = vmatpush.bf16.msra.mxu0 %v891
    %1194 = vmatpush.bf16.msra.mxu0 %v889
    %1195 = vmatpush.bf16.msra.mxu0 %v887
    %1196 = vmatpush.bf16.msra.mxu0 %v885
    %1197 = vmatpush.bf16.msra.mxu0 %v883
    %1198 = vmatpush.bf16.msra.mxu0 %v881
    %1199 = vmatpush.bf16.msra.mxu0 %v879
    %1200 = vmatmul.bf16.gmra.mxu0 %v357
    %v1201 = vpop.f32.mrf.mxu0
    %v1202 = vadd.f32 %v1188, %v1201
    %v1203 = vpop.f32.mrf.mxu0
    %v1204 = vadd.f32 %v1190, %v1203
    %1205 = vdwg.mxu0
    %1206 = vmatpush.bf16.msra.mxu0 %v909
    %1207 = vmatpush.bf16.msra.mxu0 %v907
    %1208 = vmatpush.bf16.msra.mxu0 %v905
    %1209 = vmatpush.bf16.msra.mxu0 %v903
    %1210 = vmatpush.bf16.msra.mxu0 %v901
    %1211 = vmatpush.bf16.msra.mxu0 %v899
    %1212 = vmatpush.bf16.msra.mxu0 %v897
    %1213 = vmatpush.bf16.msra.mxu0 %v895
    %1214 = vmatmul.bf16.gmra.mxu0 %v358
    %v1215 = vpop.f32.mrf.mxu0
    %v1216 = vadd.f32 %v1202, %v1215
    %v1217 = vpop.f32.mrf.mxu0
    %v1218 = vadd.f32 %v1204, %v1217
    %1219 = vdwg.mxu0
    %1220 = vmatpush.bf16.msra.mxu0 %v925
    %1221 = vmatpush.bf16.msra.mxu0 %v923
    %1222 = vmatpush.bf16.msra.mxu0 %v921
    %1223 = vmatpush.bf16.msra.mxu0 %v919
    %1224 = vmatpush.bf16.msra.mxu0 %v917
    %1225 = vmatpush.bf16.msra.mxu0 %v915
    %1226 = vmatpush.bf16.msra.mxu0 %v913
    %1227 = vmatpush.bf16.msra.mxu0 %v911
    %1228 = vmatmul.bf16.gmra.mxu0 %v359
    %v1229 = vpop.f32.mrf.mxu0
    %v1230 = vadd.f32 %v1216, %v1229
    %v1231 = vpop.f32.mrf.mxu0
    %v1232 = vadd.f32 %v1218, %v1231
    %1233 = vdwg.mxu0
    %v1234 = vmax.f32 %v1132, 0.0
    %v1235 = vmax.f32 %v1230, 0.0
    %v1236 = vmax.f32 %v1134, 0.0
    %v1237 = vmax.f32 %v1232, 0.0
    %v1238 = vpack.c.bf16 %v1236, %v1234
    %v1239 = vpack.c.bf16 %v1237, %v1235
    %v1240 = vld [vmem:[#allocation10] sm:$0xf]
    %v1241 = vld [vmem:[#allocation10 + $0x4] sm:$0xf]
    %v1242 = vld [vmem:[#allocation10 + $0x8] sm:$0xf]
    %v1243 = vld [vmem:[#allocation10 + $0xc] sm:$0xf]
    %v1244 = vld [vmem:[#allocation10 + $0x10] sm:$0xf]
    %v1245 = vld [vmem:[#allocation10 + $0x14] sm:$0xf]
    %v1246 = vld [vmem:[#allocation10 + $0x18] sm:$0xf]
    %v1247 = vld [vmem:[#allocation10 + $0x1c] sm:$0xf]
    %v1248 = vld [vmem:[#allocation10 + $0x20] sm:$0xf]
    %v1249 = vld [vmem:[#allocation10 + $0x24] sm:$0xf]
    %v1250 = vld [vmem:[#allocation10 + $0x28] sm:$0xf]
    %v1251 = vld [vmem:[#allocation10 + $0x2c] sm:$0xf]
    %v1252 = vld [vmem:[#allocation10 + $0x30] sm:$0xf]
    %v1253 = vld [vmem:[#allocation10 + $0x34] sm:$0xf]
    %v1254 = vld [vmem:[#allocation10 + $0x38] sm:$0xf]
    %v1255 = vld [vmem:[#allocation10 + $0x3c] sm:$0xf]
    %v1256 = vld [vmem:[#allocation10 + $0x40] sm:$0xf]
    %v1257 = vld [vmem:[#allocation10 + $0x44] sm:$0xf]
    %v1258 = vld [vmem:[#allocation10 + $0x48] sm:$0xf]
    %v1259 = vld [vmem:[#allocation10 + $0x4c] sm:$0xf]
    %v1260 = vld [vmem:[#allocation10 + $0x50] sm:$0xf]
    %v1261 = vld [vmem:[#allocation10 + $0x54] sm:$0xf]
    %v1262 = vld [vmem:[#allocation10 + $0x58] sm:$0xf]
    %v1263 = vld [vmem:[#allocation10 + $0x5c] sm:$0xf]
    %v1264 = vld [vmem:[#allocation10 + $0x60] sm:$0xf]
    %v1265 = vld [vmem:[#allocation10 + $0x64] sm:$0xf]
    %v1266 = vld [vmem:[#allocation10 + $0x68] sm:$0xf]
    %v1267 = vld [vmem:[#allocation10 + $0x6c] sm:$0xf]
    %v1268 = vld [vmem:[#allocation10 + $0x70] sm:$0xf]
    %v1269 = vld [vmem:[#allocation10 + $0x74] sm:$0xf]
    %v1270 = vld [vmem:[#allocation10 + $0x78] sm:$0xf]
    %v1271 = vld [vmem:[#allocation10 + $0x7c] sm:$0xf]
    %v1272 = vld [vmem:[%s6] sm:$0x1]
    %v1274 = vperm.slane %v1272, 0
    %v1308 = vunpack.c.l.b16 %v1240
    %v1309 = vunpack.c.l.b16 %v1241
    %v1310 = vunpack.c.l.b16 %v1242
    %v1311 = vunpack.c.l.b16 %v1243
    %v1312 = vunpack.c.l.b16 %v1244
    %v1313 = vunpack.c.l.b16 %v1245
    %v1314 = vunpack.c.l.b16 %v1246
    %v1315 = vunpack.c.l.b16 %v1247
    %v1316 = vunpack.c.l.b16 %v1248
    %v1317 = vunpack.c.l.b16 %v1249
    %v1318 = vunpack.c.l.b16 %v1250
    %v1319 = vunpack.c.l.b16 %v1251
    %v1320 = vunpack.c.l.b16 %v1252
    %v1321 = vunpack.c.l.b16 %v1253
    %v1322 = vunpack.c.l.b16 %v1254
    %v1323 = vunpack.c.l.b16 %v1255
    %v1324 = vunpack.c.l.b16 %v1256
    %v1325 = vunpack.c.l.b16 %v1257
    %v1326 = vunpack.c.l.b16 %v1258
    %v1327 = vunpack.c.l.b16 %v1259
    %v1328 = vunpack.c.l.b16 %v1260
    %v1329 = vunpack.c.l.b16 %v1261
    %v1330 = vunpack.c.l.b16 %v1262
    %v1331 = vunpack.c.l.b16 %v1263
    %v1332 = vunpack.c.l.b16 %v1264
    %v1333 = vunpack.c.l.b16 %v1265
    %v1334 = vunpack.c.l.b16 %v1266
    %v1335 = vunpack.c.l.b16 %v1267
    %v1336 = vunpack.c.l.b16 %v1268
    %v1337 = vunpack.c.l.b16 %v1269
    %v1338 = vunpack.c.l.b16 %v1270
    %v1339 = vunpack.c.l.b16 %v1271
    %v1340 = vpack.c.b16 %v1309, %v1308
    %v1341 = vpack.c.b16 %v1311, %v1310
    %v1342 = vpack.c.b16 %v1313, %v1312
    %v1343 = vpack.c.b16 %v1315, %v1314
    %v1344 = vpack.c.b16 %v1317, %v1316
    %v1345 = vpack.c.b16 %v1319, %v1318
    %v1346 = vpack.c.b16 %v1321, %v1320
    %v1347 = vpack.c.b16 %v1323, %v1322
    %v1348 = vpack.c.b16 %v1325, %v1324
    %v1349 = vpack.c.b16 %v1327, %v1326
    %v1350 = vpack.c.b16 %v1329, %v1328
    %v1351 = vpack.c.b16 %v1331, %v1330
    %v1352 = vpack.c.b16 %v1333, %v1332
    %v1353 = vpack.c.b16 %v1335, %v1334
    %v1354 = vpack.c.b16 %v1337, %v1336
    %v1355 = vpack.c.b16 %v1339, %v1338
    %1372 = vmatpush.bf16.msra.mxu0 %v1347
    %1373 = vmatpush.bf16.msra.mxu0 %v1346
    %1374 = vmatpush.bf16.msra.mxu0 %v1345
    %1375 = vmatpush.bf16.msra.mxu0 %v1344
    %1376 = vmatpush.bf16.msra.mxu0 %v1343
    %1377 = vmatpush.bf16.msra.mxu0 %v1342
    %1378 = vmatpush.bf16.msra.mxu0 %v1341
    %1379 = vmatpush.bf16.msra.mxu0 %v1340
    %1380 = vmatmul.bf16.gmra.mxu0 %v1238
    %v1381 = vpop.f32.mrf.mxu0
    %v1382 = vadd.f32 %v1274, %v1381
    %v1383 = vpop.f32.mrf.mxu0
    %v1384 = vadd.f32 %v1274, %v1383
    %1385 = vdwg.mxu0
    %1386 = vmatpush.bf16.msra.mxu0 %v1355
    %1387 = vmatpush.bf16.msra.mxu0 %v1354
    %1388 = vmatpush.bf16.msra.mxu0 %v1353
    %1389 = vmatpush.bf16.msra.mxu0 %v1352
    %1390 = vmatpush.bf16.msra.mxu0 %v1351
    %1391 = vmatpush.bf16.msra.mxu0 %v1350
    %1392 = vmatpush.bf16.msra.mxu0 %v1349
    %1393 = vmatpush.bf16.msra.mxu0 %v1348
    %1394 = vmatmul.bf16.gmra.mxu0 %v1239
    %v1395 = vpop.f32.mrf.mxu0
    %v1396 = vadd.f32 %v1382, %v1395
    %v1397 = vpop.f32.mrf.mxu0
    %v1398 = vadd.f32 %v1384, %v1397
    %1399 = vdwg.mxu0
    %v1400 = vmax.f32 %v1396, 0.0
    %v1401 = vmax.f32 %v1398, 0.0
    %v1402 = vpack.c.bf16 %v1401, %v1400
    %v1403 = vld [vmem:[#allocation11] sm:$0xf]
    %v1404 = vld [vmem:[#allocation11 + $0x4] sm:$0xf]
    %v1405 = vld [vmem:[#allocation11 + $0x8] sm:$0xf]
    %v1406 = vld [vmem:[#allocation11 + $0xc] sm:$0xf]
    %v1407 = vld [vmem:[#allocation11 + $0x10] sm:$0xf]
    %v1408 = vld [vmem:[#allocation11 + $0x14] sm:$0xf]
    %v1409 = vld [vmem:[#allocation11 + $0x18] sm:$0xf]
    %v1410 = vld [vmem:[#allocation11 + $0x1c] sm:$0xf]
    %v1411 = vld [vmem:[#allocation11 + $0x20] sm:$0xf]
    %v1412 = vld [vmem:[#allocation11 + $0x24] sm:$0xf]
    %v1413 = vld [vmem:[#allocation11 + $0x28] sm:$0xf]
    %v1414 = vld [vmem:[#allocation11 + $0x2c] sm:$0xf]
    %v1415 = vld [vmem:[#allocation11 + $0x30] sm:$0xf]
    %v1416 = vld [vmem:[#allocation11 + $0x34] sm:$0xf]
    %v1417 = vld [vmem:[#allocation11 + $0x38] sm:$0xf]
    %v1418 = vld [vmem:[#allocation11 + $0x3c] sm:$0xf]
    %v1419 = vld [vmem:[%s8] sm:$0x1]
    %v1421 = vperm.slane %v1419, 0
    %v1439 = vunpack.c.l.b16 %v1403
    %v1440 = vunpack.c.l.b16 %v1404
    %v1441 = vunpack.c.l.b16 %v1405
    %v1442 = vunpack.c.l.b16 %v1406
    %v1443 = vunpack.c.l.b16 %v1407
    %v1444 = vunpack.c.l.b16 %v1408
    %v1445 = vunpack.c.l.b16 %v1409
    %v1446 = vunpack.c.l.b16 %v1410
    %v1447 = vunpack.c.l.b16 %v1411
    %v1448 = vunpack.c.l.b16 %v1412
    %v1449 = vunpack.c.l.b16 %v1413
    %v1450 = vunpack.c.l.b16 %v1414
    %v1451 = vunpack.c.l.b16 %v1415
    %v1452 = vunpack.c.l.b16 %v1416
    %v1453 = vunpack.c.l.b16 %v1417
    %v1454 = vunpack.c.l.b16 %v1418
    %v1455 = vpack.c.b16 %v1440, %v1439
    %v1456 = vpack.c.b16 %v1442, %v1441
    %v1457 = vpack.c.b16 %v1444, %v1443
    %v1458 = vpack.c.b16 %v1446, %v1445
    %v1459 = vpack.c.b16 %v1448, %v1447
    %v1460 = vpack.c.b16 %v1450, %v1449
    %v1461 = vpack.c.b16 %v1452, %v1451
    %v1462 = vpack.c.b16 %v1454, %v1453
    %1471 = vmatpush.bf16.msra.mxu0 %v1462
    %1472 = vmatpush.bf16.msra.mxu0 %v1461
    %1473 = vmatpush.bf16.msra.mxu0 %v1460
    %1474 = vmatpush.bf16.msra.mxu0 %v1459
    %1475 = vmatpush.bf16.msra.mxu0 %v1458
    %1476 = vmatpush.bf16.msra.mxu0 %v1457
    %1477 = vmatpush.bf16.msra.mxu0 %v1456
    %1478 = vmatpush.bf16.msra.mxu0 %v1455
    %1479 = vmatmul.bf16.gmra.mxu0 %v1402
    %v1480 = vpop.f32.mrf.mxu0
    %v1481 = vadd.f32 %v1421, %v1480
    %v1482 = vpop.f32.mrf.mxu0
    %v1483 = vadd.f32 %v1421, %v1482
    %1484 = vdwg.mxu0
    %1485 = vst [vmem:[#allocation13] sm:$0xff] %v1481
    %1486 = vst [vmem:[#allocation13 + $0x8] sm:$0xff] %v1483
    // Predicated region
    $region62: #{tpu_custom_call.1} parent=1 // pred_check
      _
    $region63: #{tpu_custom_call.1} parent=1 // pred_check_branch
      %1488 = sbr.rel (0) target = $region65
    $region64: #{tpu_custom_call.1} parent=1 // pred_region
      %1490 = vsyncadd [#allocation4], 0
      %s1491 = sshll.u32 [#allocation13], 4
      %s1492 = int_to_ptr.vmem [resolvable:$true] %s1491
      %s1493 = sshll.u32 %s9, 4
      %s1494 = int_to_ptr.hbm [resolvable:$true] %s1493
      %1499 = dma.vmem_to_hbm [thread:$0]  %s1492, 256, %s1494, [#allocation4], 128, 128, 8
    $region65: #{tpu_custom_call.1} parent=1 // pred_fallthru
      _
    // Predicated region
    $region66: #{tpu_custom_call.1} parent=1 // pred_check
      _
    $region67: #{tpu_custom_call.1} parent=1 // pred_check_branch
      %1501 = sbr.rel (0) target = $region69
    $region68: #{tpu_custom_call.1} parent=1 // pred_region
      %1503 = dma.done [#allocation4], 256
    $region69: #{tpu_custom_call.1} parent=1 // pred_fallthru
      _
    %1504 = vsyncpa [#allocation3], 1
    %1505 = vsyncpa [#allocation6], 1
    %1506 = vsyncpa [#allocation9], 1
    %1507 = vsyncpa [#allocation12], 1
    %1508 = vsyncpa [#allocation4], 1

</llo_original>
